<compile_context>
chip_gen: v7x
topology: tpu7x:2x2x1
jax: 0.10.0
libtpu: 0.0.40
codegen_flags: <defaults>
</compile_context>

<pallas_src>
import functools

import jax
import jax.numpy as jnp
from jax.experimental import pallas as pl
from jax.experimental.pallas import tpu as pltpu


def _cdiv(a, b):
    return -(-a // b)


def _conv1d_encoder_kernel(xm_ref, xh_ref, w_ref, p_ref, o_ref, *,
                           c_in, c_out, tl, ksize, stride, eps):
    """One (batch, L-tile) step: conv1d + layernorm(channels) + relu.

    xm_ref : (1, C_in, TL*stride)  main input window (padded coordinates)
    xh_ref : (1, C_in, HW)         halo window immediately after the main window
    w_ref  : (K, C_out, C_in)      conv weight, K on the leading axis
    p_ref  : (3, C_out, 1)         packed [conv_bias, gamma, beta] (f32)
    o_ref  : (1, C_out, TL)        lane-dense output tile
    """
    xm = xm_ref[0]                                   # (C_in, TL*stride)
    xh = xh_ref[0]                                   # (C_in, HW)
    xw = jnp.concatenate([xm, xh], axis=-1)          # (C_in, TL*stride + HW)

    def shifted(t):
        if stride == 1:
            return xw[:, t:t + tl]
        # stride > 1: decimating slice on the lane axis (not exercised by the
        # stride=1 demo; kept for generality).
        return jax.lax.slice(
            xw, (0, t), (c_in, t + stride * (tl - 1) + 1), (1, stride))

    # Conv as K leading-indexed matmuls, accumulated in f32 on the MXU.
    acc = jnp.dot(w_ref[0], shifted(0), preferred_element_type=jnp.float32)
    for t in range(1, ksize):
        acc = acc + jnp.dot(w_ref[t], shifted(t),
                            preferred_element_type=jnp.float32)
    acc = acc + p_ref[0]                             # conv bias, (C_out,1)

    # LayerNorm over the channel axis (PyTorch: transpose -> LN(C) -> transpose
    # back == normalize over channels independently at every time step).
    mean = jnp.mean(acc, axis=0, keepdims=True)      # (1, TL)
    diff = acc - mean
    var = jnp.mean(diff * diff, axis=0, keepdims=True)
    inv = jax.lax.rsqrt(var + eps)                   # EUP rsqrt
    scale = p_ref[1] * inv                           # gamma * inv_std
    shift = p_ref[2] - mean * scale                  # beta - mean * scale
    y = acc * scale + shift                          # folded LN affine

    o_ref[0] = jnp.maximum(y, 0.0).astype(o_ref.dtype)   # ReLU


def conv1d_encoder(x, w, conv_bias, gamma, beta, *, stride=1, padding=1,
                   eps=1e-5, max_tile=512):
    """x: (B, C_in, L). w: (C_out, C_in, K). Returns (B, C_out, L_out)."""
    B, C_in, L = x.shape
    C_out, _, K = w.shape
    L_out = (L + 2 * padding - K) // stride + 1
    assert L_out > 0

    # ---- L tiling: lane-dense, 128-multiple output tiles -------------------
    l_out_128 = 128 * _cdiv(L_out, 128)
    TL = min(max_tile, l_out_128)                 # output columns per grid step
    NL = _cdiv(L_out, TL)                         # number of L tiles
    L_out_pad = NL * TL

    TIN = TL * stride                             # input columns per main block
    HW = 128 * _cdiv(max(K - stride, 1), 128)     # halo block width (>= K-1)
    assert TIN % HW == 0, "halo block width must divide the main input block"
    halo_scale = TIN // HW

    # One zero-pad pass provides the conv left/right zeros, the lane-alignment
    # padding and the last tile's halo in a single HBM write.
    # TODO(synk): zero-fill the edge halo inside the kernel (masked first/last
    # tile) so the un-padded x can be read straight from HBM with no extra pass.
    L_in_pad = max(NL * TIN + HW, L + padding)
    x_pad = jnp.pad(x, ((0, 0), (0, 0), (padding, L_in_pad - L - padding)))

    # Weight re-layout: K moved off the lane axis -> indexed by the leading dim.
    w3 = jnp.transpose(w, (2, 0, 1))              # (K, C_out, C_in)

    # Pack the three per-channel vectors into one small operand (one DMA).
    params = jnp.stack([conv_bias, gamma, beta]).astype(jnp.float32)
    params = params.reshape(3, C_out, 1)

    kernel = functools.partial(
        _conv1d_encoder_kernel,
        c_in=C_in, c_out=C_out, tl=TL, ksize=K, stride=stride, eps=eps)

    out_pad = pl.pallas_call(
        kernel,
        out_shape=jax.ShapeDtypeStruct((B, C_out, L_out_pad), x.dtype),
        grid_spec=pltpu.PrefetchScalarGridSpec(
            num_scalar_prefetch=0,
            grid=(B, NL),
            in_specs=[
                # main input window for this tile
                pl.BlockSpec((1, C_in, TIN), lambda b, j: (b, 0, j)),
                # halo window right after the main window
                pl.BlockSpec((1, C_in, HW),
                             lambda b, j: (b, 0, (j + 1) * halo_scale)),
                # weights / packed params: constant block, fetched once
                pl.BlockSpec((K, C_out, C_in), lambda b, j: (0, 0, 0)),
                pl.BlockSpec((3, C_out, 1), lambda b, j: (0, 0, 0)),
            ],
            out_specs=pl.BlockSpec((1, C_out, TL), lambda b, j: (b, 0, j)),
        ),
        compiler_params=pltpu.CompilerParams(
            dimension_semantics=("parallel", "parallel"),
            vmem_limit_bytes=48 * 1024 * 1024,
        ),
    )(x_pad, x_pad, w3, params)

    # Drop the lane-alignment padding.
    return out_pad[:, :, :L_out]


def _reference(x, w, conv_bias, gamma, beta, *, stride=1, padding=1, eps=1e-5):
    """Pure-JAX reference mirroring the PyTorch forward."""
    y = jax.lax.conv_general_dilated(
        x, w,
        window_strides=(stride,),
        padding=[(padding, padding)],
        dimension_numbers=("NCH", "OIH", "NCH"),
    ) + conv_bias[None, :, None]
    mean = jnp.mean(y, axis=1, keepdims=True)
    var = jnp.mean((y - mean) ** 2, axis=1, keepdims=True)
    y = (y - mean) / jnp.sqrt(var + eps)
    y = y * gamma[None, :, None] + beta[None, :, None]
    return jnp.maximum(y, 0.0)


if __name__ == "__main__":
    key = jax.random.PRNGKey(0)
    B, C_in, L = 2, 4, 16
    C_out, K, stride, padding = 8, 3, 1, 1

    k1, k2, k3, k4, k5 = jax.random.split(key, 5)
    x = jax.random.normal(k1, (B, C_in, L), dtype=jnp.float32)
    w = jax.random.normal(k2, (C_out, C_in, K), dtype=jnp.float32) * 0.1
    conv_bias = jax.random.normal(k3, (C_out,), dtype=jnp.float32) * 0.1
    gamma = 1.0 + 0.1 * jax.random.normal(k4, (C_out,), dtype=jnp.float32)
    beta = 0.1 * jax.random.normal(k5, (C_out,), dtype=jnp.float32)

    out = conv1d_encoder(x, w, conv_bias, gamma, beta,
                         stride=stride, padding=padding)
    out = jax.block_until_ready(out)

    ref = _reference(x, w, conv_bias, gamma, beta,
                     stride=stride, padding=padding)
    assert out.shape == (B, C_out, (L + 2 * padding - K) // stride + 1)
    assert jnp.allclose(out, ref, atol=1e-4, rtol=1e-4), "mismatch vs reference"

    print("KERNEL_OK")
</pallas_src>

<mosaic_0001>
module attributes {stable_mosaic.version = 11 : i64} {
  func.func @_conv1d_encoder_kernel(%arg0: i32, %arg1: i32, %arg2: memref<1x4x128xf32, #tpu.memory_space<vmem>>, %arg3: memref<1x4x128xf32, #tpu.memory_space<vmem>>, %arg4: memref<3x8x4xf32, #tpu.memory_space<vmem>>, %arg5: memref<3x8x1xf32, #tpu.memory_space<vmem>>, %arg6: memref<1x8x128xf32, #tpu.memory_space<vmem>>) attributes {dimension_semantics = [#tpu.dimension_semantics<parallel>, #tpu.dimension_semantics<parallel>], iteration_bounds = array<i64: 2, 1>, scalar_prefetch = 0 : i64, scratch_operands = 0 : i64, tpu.core_type = #tpu.core_type<tc>, window_params = [{transform_indices = @transform_0, window_bounds = array<i64: 1, 4, 128>}, {transform_indices = @transform_1, window_bounds = array<i64: 1, 4, 128>}, {pipeline_mode = #tpu.pipeline_mode<synchronous>, transform_indices = @transform_2, window_bounds = array<i64: 3, 8, 4>}, {pipeline_mode = #tpu.pipeline_mode<synchronous>, transform_indices = @transform_3, window_bounds = array<i64: 3, 8, 1>}, {transform_indices = @transform_4, window_bounds = array<i64: 1, 8, 128>}]} {
    %c0 = arith.constant 0 : index
    %c0_0 = arith.constant 0 : index
    %c0_1 = arith.constant 0 : index
    %0 = vector.load %arg2[%c0, %c0_0, %c0_1] : memref<1x4x128xf32, #tpu.memory_space<vmem>>, vector<1x4x128xf32>
    %1 = vector.shape_cast %0 : vector<1x4x128xf32> to vector<4x128xf32>
    %c0_2 = arith.constant 0 : index
    %c0_3 = arith.constant 0 : index
    %c0_4 = arith.constant 0 : index
    %2 = vector.load %arg3[%c0_2, %c0_3, %c0_4] : memref<1x4x128xf32, #tpu.memory_space<vmem>>, vector<1x4x128xf32>
    %3 = vector.shape_cast %2 : vector<1x4x128xf32> to vector<4x128xf32>
    %4 = tpu.concatenate %1, %3 in 1 : vector<4x128xf32>, vector<4x128xf32> -> vector<4x256xf32>
    %c0_5 = arith.constant 0 : index
    %c0_6 = arith.constant 0 : index
    %c0_7 = arith.constant 0 : index
    %5 = vector.load %arg4[%c0_5, %c0_6, %c0_7] : memref<3x8x4xf32, #tpu.memory_space<vmem>>, vector<1x8x4xf32>
    %6 = vector.shape_cast %5 : vector<1x8x4xf32> to vector<8x4xf32>
    %7 = vector.extract_strided_slice %4 {offsets = [0, 0], sizes = [4, 128], strides = [1, 1]} : vector<4x256xf32> to vector<4x128xf32>
    %cst = arith.constant dense<0.000000e+00> : vector<8x128xf32>
    %8 = tpu.matmul %6, %7, %cst {dimension_numbers = #tpu.dot_dimension_numbers<[1], [0], [0], [1], [0, 0, 1, 1], [], []>} : vector<8x4xf32>, vector<4x128xf32>, vector<8x128xf32> -> vector<8x128xf32>
    %c1 = arith.constant 1 : index
    %c0_8 = arith.constant 0 : index
    %c0_9 = arith.constant 0 : index
    %9 = vector.load %arg4[%c1, %c0_8, %c0_9] : memref<3x8x4xf32, #tpu.memory_space<vmem>>, vector<1x8x4xf32>
    %10 = vector.shape_cast %9 : vector<1x8x4xf32> to vector<8x4xf32>
    %11 = vector.extract_strided_slice %4 {offsets = [0, 1], sizes = [4, 128], strides = [1, 1]} : vector<4x256xf32> to vector<4x128xf32>
    %cst_10 = arith.constant dense<0.000000e+00> : vector<8x128xf32>
    %12 = tpu.matmul %10, %11, %cst_10 {dimension_numbers = #tpu.dot_dimension_numbers<[1], [0], [0], [1], [0, 0, 1, 1], [], []>} : vector<8x4xf32>, vector<4x128xf32>, vector<8x128xf32> -> vector<8x128xf32>
    %13 = arith.addf %8, %12 : vector<8x128xf32>
    %c2 = arith.constant 2 : index
    %c0_11 = arith.constant 0 : index
    %c0_12 = arith.constant 0 : index
    %14 = vector.load %arg4[%c2, %c0_11, %c0_12] : memref<3x8x4xf32, #tpu.memory_space<vmem>>, vector<1x8x4xf32>
    %15 = vector.shape_cast %14 : vector<1x8x4xf32> to vector<8x4xf32>
    %16 = vector.extract_strided_slice %4 {offsets = [0, 2], sizes = [4, 128], strides = [1, 1]} : vector<4x256xf32> to vector<4x128xf32>
    %cst_13 = arith.constant dense<0.000000e+00> : vector<8x128xf32>
    %17 = tpu.matmul %15, %16, %cst_13 {dimension_numbers = #tpu.dot_dimension_numbers<[1], [0], [0], [1], [0, 0, 1, 1], [], []>} : vector<8x4xf32>, vector<4x128xf32>, vector<8x128xf32> -> vector<8x128xf32>
    %18 = arith.addf %13, %17 : vector<8x128xf32>
    %c0_14 = arith.constant 0 : index
    %c0_15 = arith.constant 0 : index
    %c0_16 = arith.constant 0 : index
    %19 = vector.load %arg5[%c0_14, %c0_15, %c0_16] : memref<3x8x1xf32, #tpu.memory_space<vmem>>, vector<1x8x1xf32>
    %20 = vector.shape_cast %19 : vector<1x8x1xf32> to vector<8x1xf32>
    %21 = vector.broadcast %20 : vector<8x1xf32> to vector<8x128xf32>
    %22 = arith.addf %18, %21 : vector<8x128xf32>
    %cst_17 = arith.constant dense<0.000000e+00> : vector<128xf32>
    %23 = vector.multi_reduction <add>, %22, %cst_17 [0] : vector<8x128xf32> to vector<128xf32>
    %24 = vector.shape_cast %23 : vector<128xf32> to vector<1x128xf32>
    %cst_18 = arith.constant 8.000000e+00 : f32
    %25 = vector.broadcast %cst_18 : f32 to vector<1x128xf32>
    %26 = arith.divf %24, %25 : vector<1x128xf32>
    %27 = vector.broadcast %26 : vector<1x128xf32> to vector<8x128xf32>
    %28 = arith.subf %22, %27 : vector<8x128xf32>
    %29 = arith.mulf %28, %28 : vector<8x128xf32>
    %cst_19 = arith.constant dense<0.000000e+00> : vector<128xf32>
    %30 = vector.multi_reduction <add>, %29, %cst_19 [0] : vector<8x128xf32> to vector<128xf32>
    %31 = vector.shape_cast %30 : vector<128xf32> to vector<1x128xf32>
    %cst_20 = arith.constant 8.000000e+00 : f32
    %32 = vector.broadcast %cst_20 : f32 to vector<1x128xf32>
    %33 = arith.divf %31, %32 : vector<1x128xf32>
    %cst_21 = arith.constant 9.99999974E-6 : f32
    %34 = vector.broadcast %cst_21 : f32 to vector<1x128xf32>
    %35 = arith.addf %33, %34 : vector<1x128xf32>
    %36 = math.rsqrt %35 : vector<1x128xf32>
    %c1_22 = arith.constant 1 : index
    %c0_23 = arith.constant 0 : index
    %c0_24 = arith.constant 0 : index
    %37 = vector.load %arg5[%c1_22, %c0_23, %c0_24] : memref<3x8x1xf32, #tpu.memory_space<vmem>>, vector<1x8x1xf32>
    %38 = vector.shape_cast %37 : vector<1x8x1xf32> to vector<8x1xf32>
    %39 = vector.broadcast %38 : vector<8x1xf32> to vector<8x128xf32>
    %40 = vector.broadcast %36 : vector<1x128xf32> to vector<8x128xf32>
    %41 = arith.mulf %39, %40 : vector<8x128xf32>
    %c2_25 = arith.constant 2 : index
    %c0_26 = arith.constant 0 : index
    %c0_27 = arith.constant 0 : index
    %42 = vector.load %arg5[%c2_25, %c0_26, %c0_27] : memref<3x8x1xf32, #tpu.memory_space<vmem>>, vector<1x8x1xf32>
    %43 = vector.shape_cast %42 : vector<1x8x1xf32> to vector<8x1xf32>
    %44 = vector.broadcast %26 : vector<1x128xf32> to vector<8x128xf32>
    %45 = arith.mulf %44, %41 : vector<8x128xf32>
    %46 = vector.broadcast %43 : vector<8x1xf32> to vector<8x128xf32>
    %47 = arith.subf %46, %45 : vector<8x128xf32>
    %48 = arith.mulf %22, %41 : vector<8x128xf32>
    %49 = arith.addf %48, %47 : vector<8x128xf32>
    %cst_28 = arith.constant 0.000000e+00 : f32
    %50 = vector.broadcast %cst_28 : f32 to vector<8x128xf32>
    %51 = arith.maximumf %49, %50 : vector<8x128xf32>
    %c0_29 = arith.constant 0 : index
    %c0_30 = arith.constant 0 : index
    %c0_31 = arith.constant 0 : index
    %52 = vector.load %arg6[%c0_29, %c0_30, %c0_31] : memref<1x8x128xf32, #tpu.memory_space<vmem>>, vector<1x8x128xf32>
    %53 = vector.shape_cast %52 : vector<1x8x128xf32> to vector<8x128xf32>
    %54 = vector.shape_cast %51 : vector<8x128xf32> to vector<1x8x128xf32>
    tpu.vector_store %arg6[%c0_29, %c0_30, %c0_31], %54 {strides = array<i32>} : memref<1x8x128xf32, #tpu.memory_space<vmem>>, vector<1x8x128xf32>,
    return
  }
  func.func @transform_0(%arg0: i32, %arg1: i32) -> (i32, i32, i32) {
    %c0_i32 = arith.constant 0 : i32
    %c0_i32_0 = arith.constant 0 : i32
    return %arg0, %c0_i32, %arg1 : i32, i32, i32
  }
  func.func @transform_1(%arg0: i32, %arg1: i32) -> (i32, i32, i32) {
    %c1_i32 = arith.constant 1 : i32
    %0 = arith.addi %arg1, %c1_i32 : i32
    %c1_i32_0 = arith.constant 1 : i32
    %1 = arith.muli %0, %c1_i32_0 : i32
    %c0_i32 = arith.constant 0 : i32
    %c0_i32_1 = arith.constant 0 : i32
    return %arg0, %c0_i32, %1 : i32, i32, i32
  }
  func.func @transform_2(%arg0: i32, %arg1: i32) -> (i32, i32, i32) {
    %c0_i32 = arith.constant 0 : i32
    %c0_i32_0 = arith.constant 0 : i32
    %c0_i32_1 = arith.constant 0 : i32
    %c0_i32_2 = arith.constant 0 : i32
    return %c0_i32, %c0_i32_0, %c0_i32_1 : i32, i32, i32
  }
  func.func @transform_3(%arg0: i32, %arg1: i32) -> (i32, i32, i32) {
    %c0_i32 = arith.constant 0 : i32
    %c0_i32_0 = arith.constant 0 : i32
    %c0_i32_1 = arith.constant 0 : i32
    %c0_i32_2 = arith.constant 0 : i32
    return %c0_i32, %c0_i32_0, %c0_i32_1 : i32, i32, i32
  }
  func.func @transform_4(%arg0: i32, %arg1: i32) -> (i32, i32, i32) {
    %c0_i32 = arith.constant 0 : i32
    %c0_i32_0 = arith.constant 0 : i32
    return %arg0, %c0_i32, %arg1 : i32, i32, i32
  }
}

</mosaic_0001>

<llo_original>
// kernel: tpu_custom_call.1
$region0: #{tpu_custom_call.1}
  #allocation0 [shape = 'u32[]', space=smem, size = 0x4, offset = 0x4, fixed_abs, tag = 'smem constant byte address 0x4 - core index']
  #allocation1 [shape = 'u32[144,128]{1,0:T(1,128)}', space=vmem, size = 0x12000, scoped, tag = 'internal scratch']
  %s0 = inlined_call_operand.vmem [shape: f32[2,4,256], index: 0, kind: input, shape index: {}]
  %s1 = inlined_call_operand.vmem [shape: f32[2,4,256], index: 1, kind: input, shape index: {}]
  %s2 = inlined_call_operand.vmem [shape: f32[3,8,4], index: 2, kind: input, shape index: {}]
  %s3 = inlined_call_operand.vmem [shape: f32[3,8,1], index: 3, kind: input, shape index: {}]
  %s4 = inlined_call_operand.hbm [shape: f32[2,8,128], index: 4, kind: output, shape index: {}]
  %s5 = sld [smem:[#allocation0]]
  $region49: #{tpu_custom_call.1} parent=0
    _
  %s7 = ssub.s32 1, %s5
  %s8 = scalar_select 0, %s7, %s5
  $region1: #{tpu_custom_call.1} parent=0
    #allocation2 [shape = 'u8[8192]{0}', space=vmem, size = 0x2000, scoped, tag = 'output window, operand 0']
    #allocation3 [shape = 's32[2]{0}', space=sflag, size = 0x8, scoped, tag = 'scoped memory for tpu_custom_call.1']
    %9 = vsyncpa [#allocation3], 0
    %s10 = scalar_lea.sflag [#allocation3], 1
    %11 = vsyncpa %s10, 0
    loop: start=0, step=1, limit=4
    $region2: #{tpu_custom_call.1} parent=1 // loop_pre_header
      _
    $region3: #{tpu_custom_call.1} parent=1 // loop_header
      %s13 = sphi 0, %s17
      %p14 = scmp.ge.s32.totalorder %s13, 4
      %s20 = sphi 0, %s32
      %s21 = sphi 0, %s28
      %s22 = sphi 0, %s20
      %s23 = sphi 0, %s21
      %s24 = sphi 0, %s22
      %s25 = sphi 0, %s23
      %s37 = sphi 0, %s39
      %s40 = sphi 0, %s37
      %s41 = sphi 0, %s40
      %s57 = sphi 0, %s41
      %s67 = sphi 0, %s69
      %s70 = sphi 0, %s67
      %s71 = sphi 0, %s70
      %s87 = sphi 0, %s71
      %s91 = sphi 0, %s91
      %s93 = sphi 0, %s91
      %s94 = sphi 0, %s93
      %s108 = sphi 0, %s94
      %s112 = sphi 0, %s112
      %s114 = sphi 0, %s112
      %s115 = sphi 0, %s114
      %s129 = sphi 0, %s115
      %s137 = sphi 0, %s139
      %s140 = sphi 0, %s137
      %s141 = sphi 0, %s140
      %s157 = sphi 0, %s141
    $region4: #{tpu_custom_call.1} parent=1 // loop_header_branch
      %16 = sbr.rel (%p14) target = $region8
    $region5: #{tpu_custom_call.1} parent=1 // loop_body
      %s18 = ssub.s32 %s13, 1
      %s19 = ssub.s32 %s13, 2
      %s26 = sadd.s32 1, %s21
      %p27 = scmp.ge.s32.totalorder %s26, 1
      %s28 = scalar_select %p27, 0, %s26
      %s29 = sadd.s32 1, %s20
      %s30 = scalar_select %p27, %s29, %s20
      %p31 = scmp.ge.s32.totalorder %s30, 2
      %s32 = scalar_select %p31, 0, %s30
      %s33 = ssub.s32 %s20, %s32
      %s34 = ssub.s32 %s21, %s28
      %s35 = sor.u32 %s33, %s34
      %p36 = scmp.eq.s32.totalorder %s35, 0
      %s38 = sadd.s32 %s37, 1
      %s39 = scalar_select %p36, %s37, %s38
      %p42 = pneg %p36
      %p43 = scmp.eq.s32.totalorder %s13, 1
      %p44 = por %p42, %p43
      %p45 = scmp.ne.s32.totalorder %s37, %s40
      %p46 = scmp.eq.s32.totalorder %s13, 0
      %p47 = por %p45, %p46
      %p48 = scmp.ne.s32.totalorder %s37, %s40
      %p49 = scmp.eq.s32.totalorder %s18, 1
      %p50 = por %p48, %p49
      %p51 = scmp.ne.s32.totalorder %s40, %s41
      %p52 = scmp.eq.s32.totalorder %s18, 0
      %p53 = por %p51, %p52
      %p54 = scmp.ne.s32.totalorder %s40, %s41
      %p55 = scmp.eq.s32.totalorder %s19, 1
      %p56 = por %p54, %p55
      %p58 = scmp.ne.s32.totalorder %s41, %s57
      %p59 = scmp.eq.s32.totalorder %s19, 0
      %p60 = por %p58, %p59
      %s61 = sadd.s32 %s21, 1
      %s62 = sadd.s32 %s28, 1
      %s63 = ssub.s32 %s20, %s32
      %s64 = ssub.s32 %s61, %s62
      %s65 = sor.u32 %s63, %s64
      %p66 = scmp.eq.s32.totalorder %s65, 0
      %s68 = sadd.s32 %s67, 1
      %s69 = scalar_select %p66, %s67, %s68
      %p72 = pneg %p66
      %p73 = scmp.eq.s32.totalorder %s13, 1
      %p74 = por %p72, %p73
      %p75 = scmp.ne.s32.totalorder %s67, %s70
      %p76 = scmp.eq.s32.totalorder %s13, 0
      %p77 = por %p75, %p76
      %p78 = scmp.ne.s32.totalorder %s67, %s70
      %p79 = scmp.eq.s32.totalorder %s18, 1
      %p80 = por %p78, %p79
      %p81 = scmp.ne.s32.totalorder %s70, %s71
      %p82 = scmp.eq.s32.totalorder %s18, 0
      %p83 = por %p81, %p82
      %p84 = scmp.ne.s32.totalorder %s70, %s71
      %p85 = scmp.eq.s32.totalorder %s19, 1
      %p86 = por %p84, %p85
      %p88 = scmp.ne.s32.totalorder %s71, %s87
      %p89 = scmp.eq.s32.totalorder %s19, 0
      %p90 = por %p88, %p89
      %s92 = sadd.s32 %s91, 1
      %p95 = scmp.eq.s32.totalorder %s13, 1
      %p96 = scmp.ne.s32.totalorder %s91, %s93
      %p97 = scmp.eq.s32.totalorder %s13, 0
      %p98 = por %p96, %p97
      %p99 = scmp.ne.s32.totalorder %s91, %s93
      %p100 = scmp.eq.s32.totalorder %s18, 1
      %p101 = por %p99, %p100
      %p102 = scmp.ne.s32.totalorder %s93, %s94
      %p103 = scmp.eq.s32.totalorder %s18, 0
      %p104 = por %p102, %p103
      %p105 = scmp.ne.s32.totalorder %s93, %s94
      %p106 = scmp.eq.s32.totalorder %s19, 1
      %p107 = por %p105, %p106
      %p109 = scmp.ne.s32.totalorder %s94, %s108
      %p110 = scmp.eq.s32.totalorder %s19, 0
      %p111 = por %p109, %p110
      %s113 = sadd.s32 %s112, 1
      %p116 = scmp.eq.s32.totalorder %s13, 1
      %p117 = scmp.ne.s32.totalorder %s112, %s114
      %p118 = scmp.eq.s32.totalorder %s13, 0
      %p119 = por %p117, %p118
      %p120 = scmp.ne.s32.totalorder %s112, %s114
      %p121 = scmp.eq.s32.totalorder %s18, 1
      %p122 = por %p120, %p121
      %p123 = scmp.ne.s32.totalorder %s114, %s115
      %p124 = scmp.eq.s32.totalorder %s18, 0
      %p125 = por %p123, %p124
      %p126 = scmp.ne.s32.totalorder %s114, %s115
      %p127 = scmp.eq.s32.totalorder %s19, 1
      %p128 = por %p126, %p127
      %p130 = scmp.ne.s32.totalorder %s115, %s129
      %p131 = scmp.eq.s32.totalorder %s19, 0
      %p132 = por %p130, %p131
      %s133 = ssub.s32 %s20, %s32
      %s134 = ssub.s32 %s21, %s28
      %s135 = sor.u32 %s133, %s134
      %p136 = scmp.eq.s32.totalorder %s135, 0
      %s138 = sadd.s32 %s137, 1
      %s139 = scalar_select %p136, %s137, %s138
      %p142 = pneg %p136
      %p143 = scmp.eq.s32.totalorder %s13, 1
      %p144 = por %p142, %p143
      %p145 = scmp.ne.s32.totalorder %s137, %s140
      %p146 = scmp.eq.s32.totalorder %s13, 0
      %p147 = por %p145, %p146
      %p148 = scmp.ne.s32.totalorder %s137, %s140
      %p149 = scmp.eq.s32.totalorder %s18, 1
      %p150 = por %p148, %p149
      %p151 = scmp.ne.s32.totalorder %s140, %s141
      %p152 = scmp.eq.s32.totalorder %s18, 0
      %p153 = por %p151, %p152
      %p154 = scmp.ne.s32.totalorder %s140, %s141
      %p155 = scmp.eq.s32.totalorder %s19, 1
      %p156 = por %p154, %p155
      %p158 = scmp.ne.s32.totalorder %s141, %s157
      %p159 = scmp.eq.s32.totalorder %s19, 0
      %p160 = por %p158, %p159
      %p161 = scmp.le.s32.totalorder 1, %s13
      %p162 = scmp.lt.s32.totalorder %s13, 3
      %p163 = pnand %p161, %p162
      %p164 = pneg %p163
      // Predicated region
      $region9: #{tpu_custom_call.1} parent=5 // pred_check
        _
      $region10: #{tpu_custom_call.1} parent=5 // pred_check_branch
        %166 = sbr.rel (%p163) target = $region12
      $region11: #{tpu_custom_call.1} parent=5 // pred_region
        %s167 = ssub.s32 %s13, 1
        // Predicated region
        $region13: #{tpu_custom_call.1} parent=11 // pred_check
          %p168 = pneg %p104
        $region14: #{tpu_custom_call.1} parent=11 // pred_check_branch
          %170 = sbr.rel (%p168) target = $region16
        $region15: #{tpu_custom_call.1} parent=11 // pred_region
          _
        $region16: #{tpu_custom_call.1} parent=11 // pred_fallthru
          _
        // Predicated region
        $region17: #{tpu_custom_call.1} parent=11 // pred_check
          %p171 = pneg %p125
        $region18: #{tpu_custom_call.1} parent=11 // pred_check_branch
          %173 = sbr.rel (%p171) target = $region20
        $region19: #{tpu_custom_call.1} parent=11 // pred_region
          _
        $region20: #{tpu_custom_call.1} parent=11 // pred_fallthru
          _
      $region12: #{tpu_custom_call.1} parent=5 // pred_fallthru
        _
      %p174 = scmp.lt.s32.totalorder %s13, 2
      // Predicated region
      $region21: #{tpu_custom_call.1} parent=5 // pred_check
        %p175 = pneg %p174
      $region22: #{tpu_custom_call.1} parent=5 // pred_check_branch
        %177 = sbr.rel (%p175) target = $region24
      $region23: #{tpu_custom_call.1} parent=5 // pred_region
        // Predicated region
        $region25: #{tpu_custom_call.1} parent=23 // pred_check
          %p178 = pneg %p47
        $region26: #{tpu_custom_call.1} parent=23 // pred_check_branch
          %180 = sbr.rel (%p178) target = $region28
        $region27: #{tpu_custom_call.1} parent=23 // pred_region
          %p181 = scmp.lt.s32.totalorder %s20, 1
          %s182 = scalar_select %p181, %s20, 1
          %p183 = scmp.lt.s32.totalorder %s21, 1
          %s184 = scalar_select %p183, %s21, 1
          %s185 = smul.addr %s182, 2
          %s186 = sadd.s32 %s184, %s185
          %s187 = smul.addr %s186, 4
          %s188 = scalar_lea.vmem %s0, %s187
        $region28: #{tpu_custom_call.1} parent=23 // pred_fallthru
          _
        // Predicated region
        $region29: #{tpu_custom_call.1} parent=23 // pred_check
          %p189 = pneg %p77
        $region30: #{tpu_custom_call.1} parent=23 // pred_check_branch
          %191 = sbr.rel (%p189) target = $region32
        $region31: #{tpu_custom_call.1} parent=23 // pred_region
          %s192 = sadd.s32 %s21, 1
          %p193 = scmp.lt.s32.totalorder %s20, 1
          %s194 = scalar_select %p193, %s20, 1
          %p195 = scmp.lt.s32.totalorder %s192, 1
          %s196 = scalar_select %p195, %s192, 1
          %s197 = smul.addr %s194, 2
          %s198 = sadd.s32 %s196, %s197
          %s199 = smul.addr %s198, 4
          %s200 = scalar_lea.vmem %s1, %s199
          %s201 = sadd.s32 %s21, 1
        $region32: #{tpu_custom_call.1} parent=23 // pred_fallthru
          _
      $region24: #{tpu_custom_call.1} parent=5 // pred_fallthru
        _
      %p202 = scmp.le.s32.totalorder 1, %s13
      %p203 = scmp.lt.s32.totalorder %s13, 3
      %p204 = pnand %p202, %p203
      %p205 = pneg %p204
      // Predicated region
      $region33: #{tpu_custom_call.1} parent=5 // pred_check
        _
      $region34: #{tpu_custom_call.1} parent=5 // pred_check_branch
        %207 = sbr.rel (%p204) target = $region36
      $region35: #{tpu_custom_call.1} parent=5 // pred_region
        %s208 = ssub.s32 %s13, 1
        %p209 = scmp.lt.s32.totalorder %s22, 1
        %s210 = scalar_select %p209, %s22, 1
        %p211 = scmp.lt.s32.totalorder %s23, 1
        %s212 = scalar_select %p211, %s23, 1
        %s213 = smul.addr %s210, 2
        %s214 = sadd.s32 %s212, %s213
        %s215 = smul.addr %s214, 4
        %s216 = scalar_lea.vmem %s0, %s215
        %p217 = pneg %p53
        %p218 = pneg %p50
        %s219 = sadd.s32 %s23, 1
        %p220 = scmp.lt.s32.totalorder %s22, 1
        %s221 = scalar_select %p220, %s22, 1
        %p222 = scmp.lt.s32.totalorder %s219, 1
        %s223 = scalar_select %p222, %s219, 1
        %s224 = smul.addr %s221, 2
        %s225 = sadd.s32 %s223, %s224
        %s226 = smul.addr %s225, 4
        %s227 = scalar_lea.vmem %s1, %s226
        %p228 = pneg %p83
        %p229 = pneg %p80
        %p230 = pneg %p104
        %p231 = pneg %p101
        %p232 = pneg %p125
        %p233 = pneg %p122
        %p234 = pneg %p153
        %p235 = pneg %p150
        %s236 = sand.u32 %s140, 1
        %s237 = scalar_lea.sflag [#allocation3], %s236
        %s238 = sand.u32 %s140, 1
        %s239 = smul.addr %s238, 8
        %s240 = scalar_lea.vmem [#allocation2], %s239
        %p241 = scmp.lt.s32.totalorder %s22, 1
        %s242 = scalar_select %p241, %s22, 1
        %p243 = scmp.lt.s32.totalorder %s23, 1
        %s244 = scalar_select %p243, %s23, 1
        %s245 = smul.addr %s242, 2
        %s246 = sadd.s32 %s244, %s245
        %s247 = smul.addr %s246, 4
        %s248 = scalar_lea.vmem %s0, %s247
        %s249 = sadd.s32 %s23, 1
        %p250 = scmp.lt.s32.totalorder %s22, 1
        %s251 = scalar_select %p250, %s22, 1
        %p252 = scmp.lt.s32.totalorder %s249, 1
        %s253 = scalar_select %p252, %s249, 1
        %s254 = smul.addr %s251, 2
        %s255 = sadd.s32 %s253, %s254
        %s256 = smul.addr %s255, 4
        %s257 = scalar_lea.vmem %s1, %s256
        %s258 = sadd.s32 %s23, 1
        %v259 = vld [vmem:[%s248] sm:$0xf]
        %v260 = vld [vmem:[%s257] sm:$0xf]
        %v261 = vld [vmem:[%s2] sm:$0xff]
        %s262 = scalar_lea.vmem %s2, 8
        %v263 = vld [vmem:[%s262] sm:$0xff]
        %266 = vrot.lane.b32.xlu0 %v259, 127
        %v267 = vpop.permute.xlu0 %266
        %268 = vrot.lane.b32.xlu0 %v260, 127
        %v269 = vpop.permute.xlu0 %268
        %vm270 = vcmask 1039360
        %v271 = vsel %vm270, %v267, %v269
        %vm272 = vcmask 31744
        %v274 = vsel %vm272, %v263, 0
        %vm276 = vcmask 1043456
        %v277 = vsel %vm276, %v271, 0
        %279 = vmatprep.subr.mxu0 0.0
        %280 = vmatpush1.msra.mxu0 %v277
        %281 = vmatprep.subr.mxu0 0.0
        %282 = vmatpush1.msra.mxu0 0.0
        %283 = vmatprep.subr.mxu0 0.0
        %284 = vmatpush1.msra.mxu0 0.0
        %285 = vmatprep.subr.mxu0 0.0
        %286 = vmatpush1.msra.mxu0 0.0
        %287 = vmatprep.subr.mxu0 0.0
        %288 = vmatpush1.msra.mxu0 0.0
        %289 = vmatprep.subr.mxu0 0.0
        %290 = vmatpush1.msra.mxu0 0.0
        %291 = vmatprep.subr.mxu0 0.0
        %292 = vmatpush1.msra.mxu0 0.0
        %293 = vmatprep.subr.mxu0 0.0
        %294 = vmatpush1.msra.mxu0 0.0
        %295 = vmatprep.subr.mxu0 0.0
        %296 = vmatpush1.msra.mxu0 0.0
        %297 = vmatprep.subr.mxu0 0.0
        %298 = vmatpush1.msra.mxu0 0.0
        %299 = vmatprep.subr.mxu0 0.0
        %300 = vmatpush1.msra.mxu0 0.0
        %301 = vmatprep.subr.mxu0 0.0
        %302 = vmatpush1.msra.mxu0 0.0
        %303 = vmatprep.subr.mxu0 0.0
        %304 = vmatpush1.msra.mxu0 0.0
        %305 = vmatprep.subr.mxu0 0.0
        %306 = vmatpush1.msra.mxu0 0.0
        %307 = vmatprep.subr.mxu0 0.0
        %308 = vmatpush1.msra.mxu0 0.0
        %309 = vmatprep.subr.mxu0 0.0
        %310 = vmatpush1.msra.mxu0 0.0
        %311 = vmatprep.subr.mxu0 0.0
        %312 = vmatpush1.msra.mxu0 0.0
        %313 = vmatprep.subr.mxu0 0.0
        %314 = vmatpush1.msra.mxu0 0.0
        %315 = vmatprep.subr.mxu0 0.0
        %316 = vmatpush1.msra.mxu0 0.0
        %317 = vmatprep.subr.mxu0 0.0
        %318 = vmatpush1.msra.mxu0 0.0
        %319 = vmatprep.subr.mxu0 0.0
        %320 = vmatpush1.msra.mxu0 0.0
        %321 = vmatprep.subr.mxu0 0.0
        %322 = vmatpush1.msra.mxu0 0.0
        %323 = vmatprep.subr.mxu0 0.0
        %324 = vmatpush1.msra.mxu0 0.0
        %325 = vmatprep.subr.mxu0 0.0
        %326 = vmatpush1.msra.mxu0 0.0
        %327 = vmatprep.subr.mxu0 0.0
        %328 = vmatpush1.msra.mxu0 0.0
        %329 = vmatprep.subr.mxu0 0.0
        %330 = vmatpush1.msra.mxu0 0.0
        %331 = vmatprep.subr.mxu0 0.0
        %332 = vmatpush1.msra.mxu0 0.0
        %333 = vmatprep.subr.mxu0 0.0
        %334 = vmatpush1.msra.mxu0 0.0
        %335 = vmatprep.subr.mxu0 0.0
        %336 = vmatpush1.msra.mxu0 0.0
        %337 = vmatprep.subr.mxu0 0.0
        %338 = vmatpush1.msra.mxu0 0.0
        %339 = vmatprep.subr.mxu0 0.0
        %340 = vmatpush1.msra.mxu0 0.0
        %341 = vmatprep.subr.mxu0 0.0
        %342 = vmatpush1.msra.mxu0 0.0
        %343 = vmatprep.mubr.f32.mxu0 0.0
        %344 = vmatmul.mubr.f32.gmra.mrb[0].mxu0 %v274
        %v345 = vpop.f32.mrb[0].mxu0
        %v346 = vadd.f32 0.0, %v345
        %v347 = vpop.f32.mrb[0].mxu0
        %348 = vdwg.mxu0
        %v350 = vsel %vm272, %v261, 0
        %v352 = vsel %vm276, %v259, 0
        %354 = vmatprep.subr.mxu0 0.0
        %355 = vmatpush1.msra.mxu0 %v352
        %356 = vmatprep.subr.mxu0 0.0
        %357 = vmatpush1.msra.mxu0 0.0
        %358 = vmatprep.subr.mxu0 0.0
        %359 = vmatpush1.msra.mxu0 0.0
        %360 = vmatprep.subr.mxu0 0.0
        %361 = vmatpush1.msra.mxu0 0.0
        %362 = vmatprep.subr.mxu0 0.0
        %363 = vmatpush1.msra.mxu0 0.0
        %364 = vmatprep.subr.mxu0 0.0
        %365 = vmatpush1.msra.mxu0 0.0
        %366 = vmatprep.subr.mxu0 0.0
        %367 = vmatpush1.msra.mxu0 0.0
        %368 = vmatprep.subr.mxu0 0.0
        %369 = vmatpush1.msra.mxu0 0.0
        %370 = vmatprep.subr.mxu0 0.0
        %371 = vmatpush1.msra.mxu0 0.0
        %372 = vmatprep.subr.mxu0 0.0
        %373 = vmatpush1.msra.mxu0 0.0
        %374 = vmatprep.subr.mxu0 0.0
        %375 = vmatpush1.msra.mxu0 0.0
        %376 = vmatprep.subr.mxu0 0.0
        %377 = vmatpush1.msra.mxu0 0.0
        %378 = vmatprep.subr.mxu0 0.0
        %379 = vmatpush1.msra.mxu0 0.0
        %380 = vmatprep.subr.mxu0 0.0
        %381 = vmatpush1.msra.mxu0 0.0
        %382 = vmatprep.subr.mxu0 0.0
        %383 = vmatpush1.msra.mxu0 0.0
        %384 = vmatprep.subr.mxu0 0.0
        %385 = vmatpush1.msra.mxu0 0.0
        %386 = vmatprep.subr.mxu0 0.0
        %387 = vmatpush1.msra.mxu0 0.0
        %388 = vmatprep.subr.mxu0 0.0
        %389 = vmatpush1.msra.mxu0 0.0
        %390 = vmatprep.subr.mxu0 0.0
        %391 = vmatpush1.msra.mxu0 0.0
        %392 = vmatprep.subr.mxu0 0.0
        %393 = vmatpush1.msra.mxu0 0.0
        %394 = vmatprep.subr.mxu0 0.0
        %395 = vmatpush1.msra.mxu0 0.0
        %396 = vmatprep.subr.mxu0 0.0
        %397 = vmatpush1.msra.mxu0 0.0
        %398 = vmatprep.subr.mxu0 0.0
        %399 = vmatpush1.msra.mxu0 0.0
        %400 = vmatprep.subr.mxu0 0.0
        %401 = vmatpush1.msra.mxu0 0.0
        %402 = vmatprep.subr.mxu0 0.0
        %403 = vmatpush1.msra.mxu0 0.0
        %404 = vmatprep.subr.mxu0 0.0
        %405 = vmatpush1.msra.mxu0 0.0
        %406 = vmatprep.subr.mxu0 0.0
        %407 = vmatpush1.msra.mxu0 0.0
        %408 = vmatprep.subr.mxu0 0.0
        %409 = vmatpush1.msra.mxu0 0.0
        %410 = vmatprep.subr.mxu0 0.0
        %411 = vmatpush1.msra.mxu0 0.0
        %412 = vmatprep.subr.mxu0 0.0
        %413 = vmatpush1.msra.mxu0 0.0
        %414 = vmatprep.subr.mxu0 0.0
        %415 = vmatpush1.msra.mxu0 0.0
        %416 = vmatprep.subr.mxu0 0.0
        %417 = vmatpush1.msra.mxu0 0.0
        %418 = vmatprep.mubr.f32.mxu0 0.0
        %419 = vmatmul.mubr.f32.gmra.mrb[0].mxu0 %v350
        %v420 = vpop.f32.mrb[0].mxu0
        %v421 = vadd.f32 %v346, %v420
        %v422 = vpop.f32.mrb[0].mxu0
        %423 = vdwg.mxu0
        %s424 = scalar_lea.vmem %s2, 16
        %v425 = vld [vmem:[%s424] sm:$0xff]
        %426 = vrot.lane.b32.xlu0 %v259, 126
        %v427 = vpop.permute.xlu0 %426
        %428 = vrot.lane.b32.xlu0 %v260, 126
        %v429 = vpop.permute.xlu0 %428
        %vm430 = vcmask 1031168
        %v431 = vsel %vm430, %v427, %v429
        %v433 = vsel %vm272, %v425, 0
        %v435 = vsel %vm276, %v431, 0
        %437 = vmatprep.subr.mxu0 0.0
        %438 = vmatpush1.msra.mxu0 %v435
        %439 = vmatprep.subr.mxu0 0.0
        %440 = vmatpush1.msra.mxu0 0.0
        %441 = vmatprep.subr.mxu0 0.0
        %442 = vmatpush1.msra.mxu0 0.0
        %443 = vmatprep.subr.mxu0 0.0
        %444 = vmatpush1.msra.mxu0 0.0
        %445 = vmatprep.subr.mxu0 0.0
        %446 = vmatpush1.msra.mxu0 0.0
        %447 = vmatprep.subr.mxu0 0.0
        %448 = vmatpush1.msra.mxu0 0.0
        %449 = vmatprep.subr.mxu0 0.0
        %450 = vmatpush1.msra.mxu0 0.0
        %451 = vmatprep.subr.mxu0 0.0
        %452 = vmatpush1.msra.mxu0 0.0
        %453 = vmatprep.subr.mxu0 0.0
        %454 = vmatpush1.msra.mxu0 0.0
        %455 = vmatprep.subr.mxu0 0.0
        %456 = vmatpush1.msra.mxu0 0.0
        %457 = vmatprep.subr.mxu0 0.0
        %458 = vmatpush1.msra.mxu0 0.0
        %459 = vmatprep.subr.mxu0 0.0
        %460 = vmatpush1.msra.mxu0 0.0
        %461 = vmatprep.subr.mxu0 0.0
        %462 = vmatpush1.msra.mxu0 0.0
        %463 = vmatprep.subr.mxu0 0.0
        %464 = vmatpush1.msra.mxu0 0.0
        %465 = vmatprep.subr.mxu0 0.0
        %466 = vmatpush1.msra.mxu0 0.0
        %467 = vmatprep.subr.mxu0 0.0
        %468 = vmatpush1.msra.mxu0 0.0
        %469 = vmatprep.subr.mxu0 0.0
        %470 = vmatpush1.msra.mxu0 0.0
        %471 = vmatprep.subr.mxu0 0.0
        %472 = vmatpush1.msra.mxu0 0.0
        %473 = vmatprep.subr.mxu0 0.0
        %474 = vmatpush1.msra.mxu0 0.0
        %475 = vmatprep.subr.mxu0 0.0
        %476 = vmatpush1.msra.mxu0 0.0
        %477 = vmatprep.subr.mxu0 0.0
        %478 = vmatpush1.msra.mxu0 0.0
        %479 = vmatprep.subr.mxu0 0.0
        %480 = vmatpush1.msra.mxu0 0.0
        %481 = vmatprep.subr.mxu0 0.0
        %482 = vmatpush1.msra.mxu0 0.0
        %483 = vmatprep.subr.mxu0 0.0
        %484 = vmatpush1.msra.mxu0 0.0
        %485 = vmatprep.subr.mxu0 0.0
        %486 = vmatpush1.msra.mxu0 0.0
        %487 = vmatprep.subr.mxu0 0.0
        %488 = vmatpush1.msra.mxu0 0.0
        %489 = vmatprep.subr.mxu0 0.0
        %490 = vmatpush1.msra.mxu0 0.0
        %491 = vmatprep.subr.mxu0 0.0
        %492 = vmatpush1.msra.mxu0 0.0
        %493 = vmatprep.subr.mxu0 0.0
        %494 = vmatpush1.msra.mxu0 0.0
        %495 = vmatprep.subr.mxu0 0.0
        %496 = vmatpush1.msra.mxu0 0.0
        %497 = vmatprep.subr.mxu0 0.0
        %498 = vmatpush1.msra.mxu0 0.0
        %499 = vmatprep.subr.mxu0 0.0
        %500 = vmatpush1.msra.mxu0 0.0
        %501 = vmatprep.mubr.f32.mxu0 0.0
        %502 = vmatmul.mubr.f32.gmra.mrb[0].mxu0 %v433
        %v503 = vpop.f32.mrb[0].mxu0
        %v504 = vadd.f32 0.0, %v503
        %v505 = vpop.f32.mrb[0].mxu0
        %506 = vdwg.mxu0
        %v507 = vadd.f32 %v421, %v504
        %v508 = vld [vmem:[%s3] sm:$0xff]
        %510 = vset.pattern.permute.xlu0 0
        %511 = vperm.xlu0 %510, %v508
        %v512 = vpop.permute.xlu0 %511
        %v514 = vadd.f32 %v507, %v512
        %v515 = vrot.slane %v514, 4
        %v516 = vadd.f32 %v514, %v515
        %v517 = vrot.slane %v516, 2
        %v518 = vadd.f32 %v516, %v517
        %v519 = vrot.slane %v518, 1
        %v520 = vadd.f32 %v518, %v519
        %v521 = vrcp.pop 8.0
        %v522 = vmul.f32 %v520, %v521
        %v523 = vsub.f32 %v514, %v522
        %v524 = vmul.f32 %v523, %v523
        %v525 = vrot.slane %v524, 4
        %v526 = vadd.f32 %v524, %v525
        %v527 = vrot.slane %v526, 2
        %v528 = vadd.f32 %v526, %v527
        %v529 = vrot.slane %v528, 1
        %v530 = vadd.f32 %v528, %v529
        %v531 = vmul.f32 %v530, %v521
        %v532 = vadd.f32 %v531, 1e-05
        %v533 = vrsqrt.pop %v532
        %s534 = scalar_lea.vmem %s3, 8
        %v535 = vld [vmem:[%s534] sm:$0xff]
        %537 = vset.pattern.permute.xlu0 0
        %538 = vperm.xlu0 %537, %v535
        %v539 = vpop.permute.xlu0 %538
        %v541 = vmul.f32 %v539, %v533
        %s542 = scalar_lea.vmem %s3, 16
        %v543 = vld [vmem:[%s542] sm:$0xff]
        %v544 = vmul.f32 %v522, %v541
        %546 = vset.pattern.permute.xlu0 0
        %547 = vperm.xlu0 %546, %v543
        %v548 = vpop.permute.xlu0 %547
        %v550 = vsub.f32 %v548, %v544
        %v551 = vmul.f32 %v514, %v541
        %v552 = vadd.f32 %v551, %v550
        %v553 = vmax.f32 %v552, 0.0
        %554 = vst [vmem:[%s240] sm:$0xff] %v553
        %s555 = sand.u32 %s140, 1
        %s556 = scalar_lea.sflag [#allocation3], %s555
        %s557 = sand.u32 %s140, 1
        %s558 = smul.addr %s557, 8
        %s559 = scalar_lea.vmem [#allocation2], %s558
        // Predicated region
        $region37: #{tpu_custom_call.1} parent=35 // pred_check
          %p560 = pneg %p150
        $region38: #{tpu_custom_call.1} parent=35 // pred_check_branch
          %562 = sbr.rel (%p560) target = $region40
        $region39: #{tpu_custom_call.1} parent=35 // pred_region
          %s564 = ssub.s32 128, 128
          %565 = vsyncadd %s556, %s564
          %s566 = sadd.s32 %s23, %s22
          %s567 = smul.addr %s566, 128
          %s568 = scalar_lea.hbm %s4, %s567
          %s570 = sshll.u32 %s559, 4
          %s571 = int_to_ptr.vmem [resolvable:$true] %s570
          %573 = dma.vmem_to_hbm [thread:$0]  %s571, 128, %s568, %s556
        $region40: #{tpu_custom_call.1} parent=35 // pred_fallthru
          _
      $region36: #{tpu_custom_call.1} parent=5 // pred_fallthru
        _
      %p574 = scmp.le.s32.totalorder 2, %s13
      // Predicated region
      $region41: #{tpu_custom_call.1} parent=5 // pred_check
        %p575 = pneg %p574
      $region42: #{tpu_custom_call.1} parent=5 // pred_check_branch
        %577 = sbr.rel (%p575) target = $region44
      $region43: #{tpu_custom_call.1} parent=5 // pred_region
        %s578 = ssub.s32 %s13, 2
        // Predicated region
        $region45: #{tpu_custom_call.1} parent=43 // pred_check
          %p579 = pneg %p156
        $region46: #{tpu_custom_call.1} parent=43 // pred_check_branch
          %581 = sbr.rel (%p579) target = $region48
        $region47: #{tpu_custom_call.1} parent=43 // pred_region
          %s582 = sand.u32 %s141, 1
          %s583 = scalar_lea.sflag [#allocation3], %s582
          %s584 = sand.u32 %s141, 1
          %s585 = smul.addr %s584, 8
          %s586 = scalar_lea.vmem [#allocation2], %s585
          %587 = dma.done %s583, 128
        $region48: #{tpu_custom_call.1} parent=43 // pred_fallthru
          _
      $region44: #{tpu_custom_call.1} parent=5 // pred_fallthru
        _
    $region6: #{tpu_custom_call.1} parent=1 // loop_footer
      %s17 = sadd.s32 1, %s13
    $region7: #{tpu_custom_call.1} parent=1 // loop_footer_branch
      %12 = sbr.rel target = $region3
    $region8: #{tpu_custom_call.1} parent=1 // loop_exit
      _
    %588 = vsyncpa [#allocation3], 1
    %s589 = scalar_lea.sflag [#allocation3], 1
    %590 = vsyncpa %s589, 1

</llo_original>
